<compile_context>
chip_gen: v7x
topology: tpu7x:2x2x1
jax: 0.10.0
libtpu: 0.0.40
codegen_flags: <defaults>
</compile_context>

<pallas_src>
import functools

import jax
import jax.numpy as jnp
from jax.experimental import pallas as pl
from jax.experimental.pallas import tpu as pltpu

_LANES = 128
_SUBLANES = 8
# Below this element count, a fused XLA reduction is strictly faster than a
# Pallas launch (typical DSSMD airlight is (B, 3) ~ a handful of elements).
_XLA_FAST_PATH_ELEMS = 32 * _LANES          # 4096 elements
_VMEM_LIMIT_BYTES = 32 * 1024 * 1024        # legal on v5e/v6e/v7x


def _round_up(x, m):
    return ((x + m - 1) // m) * m


def _l1_partial_kernel(a_ref, b_ref, out_ref, *, rows_per_tile, rows_total,
                       needs_mask):
    """One row-tile: sum |a - b| down to an (8, 128) partial, stored per-tile."""
    a = a_ref[...].astype(jnp.float32)          # (rows_per_tile, 128)
    b = b_ref[...].astype(jnp.float32)
    diff = jnp.abs(a - b)
    if needs_mask:
        # Zero out rows past the true row count (ragged last tile).  `rows_total`
        # is a trace-time Python int, so no scalar prefetch is needed.
        row0 = pl.program_id(0) * rows_per_tile
        rows = jax.lax.broadcasted_iota(jnp.int32, diff.shape, 0) + row0
        diff = jnp.where(rows < rows_total, diff, 0.0)
    # Reduce vreg groups with pure vector adds; keep an (8,128) vreg-shaped
    # partial so the output store is one unmasked full-vreg write per step.
    partial = jnp.sum(
        diff.reshape(rows_per_tile // _SUBLANES, _SUBLANES, _LANES), axis=0)
    out_ref[...] = partial[None, :, :]


def airlight_l1_loss(pred_air, gt_air, *, max_rows_per_tile=8192):
    """Pallas port of Airlight_Loss.forward (type='l1_loss'): mean |pred - gt|."""
    if pred_air.shape != gt_air.shape:
        raise ValueError("pred_air and gt_air must have the same shape")

    out_dtype = jnp.result_type(pred_air.dtype, gt_air.dtype)
    if not jnp.issubdtype(out_dtype, jnp.floating):
        # A mean of integer inputs must not be truncated back to int.
        out_dtype = jnp.float32

    # Flatten (metadata-only for standard layouts); keep native dtype — no
    # wrapper-side upcast copy, the f32 cast happens in-register in the kernel.
    pred = jnp.ravel(pred_air)
    gt = jnp.ravel(gt_air)
    n = pred.shape[0]

    # ---- Fast path: tiny inputs (the typical (B, 3) airlight) -------------
    if n <= _XLA_FAST_PATH_ELEMS:
        loss = jnp.mean(jnp.abs(pred.astype(jnp.float32) - gt.astype(jnp.float32)))
        return loss.astype(out_dtype)

    # ---- Streaming Pallas path --------------------------------------------
    rows_total = n // _LANES
    n_main = rows_total * _LANES
    n_tail = n - n_main                      # < 128 elements, reduced in XLA

    rows_per_tile = _round_up(max(int(max_rows_per_tile), _SUBLANES), _SUBLANES)
    rows_per_tile = min(rows_per_tile, _round_up(rows_total, _SUBLANES))
    num_tiles = pl.cdiv(rows_total, rows_per_tile)
    needs_mask = (rows_total % rows_per_tile) != 0

    if n_tail == 0:
        a2d = pred.reshape(rows_total, _LANES)      # free reshape, no copy
        b2d = gt.reshape(rows_total, _LANES)
    else:
        # TODO(synk): when n % 128 != 0 the prefix slice below materializes one
        # extra copy of the main body; avoiding it would require a manual-DMA
        # (memory_space=pl.ANY) 1-D layout, which is not worth it here.
        a2d = pred[:n_main].reshape(rows_total, _LANES)
        b2d = gt[:n_main].reshape(rows_total, _LANES)

    kernel = functools.partial(
        _l1_partial_kernel,
        rows_per_tile=rows_per_tile,
        rows_total=rows_total,
        needs_mask=needs_mask,
    )

    partials = pl.pallas_call(
        kernel,
        out_shape=jax.ShapeDtypeStruct((num_tiles, _SUBLANES, _LANES), jnp.float32),
        grid_spec=pltpu.PrefetchScalarGridSpec(
            num_scalar_prefetch=0,
            grid=(num_tiles,),
            in_specs=[
                pl.BlockSpec((rows_per_tile, _LANES), lambda i: (i, 0)),
                pl.BlockSpec((rows_per_tile, _LANES), lambda i: (i, 0)),
            ],
            out_specs=pl.BlockSpec((1, _SUBLANES, _LANES), lambda i: (i, 0, 0)),
        ),
        compiler_params=pltpu.CompilerParams(
            dimension_semantics=("parallel",),
            vmem_limit_bytes=_VMEM_LIMIT_BYTES,
        ),
    )(a2d, b2d)

    total = jnp.sum(partials, dtype=jnp.float32)     # tiny tree-sum of partials
    if n_tail:
        total = total + jnp.sum(
            jnp.abs(pred[n_main:].astype(jnp.float32)
                    - gt[n_main:].astype(jnp.float32)))
    loss = total / jnp.float32(n)
    return loss.astype(out_dtype)


if __name__ == "__main__":
    key = jax.random.PRNGKey(0)
    k1, k2, k3, k4, k5, k6 = jax.random.split(key, 6)

    # 1) Typical DSSMD airlight prediction: one RGB atmospheric light per image
    #    (takes the XLA fast path).
    B = 2
    pred_air = jax.random.uniform(k1, (B, 3), jnp.float32, minval=0.5, maxval=1.0)
    gt_air = jax.random.uniform(k2, (B, 3), jnp.float32, minval=0.5, maxval=1.0)
    loss = airlight_l1_loss(pred_air, gt_air)
    jax.block_until_ready(loss)
    ref = jnp.mean(jnp.abs(pred_air - gt_air))
    assert jnp.allclose(loss, ref, rtol=1e-5, atol=1e-6), (loss, ref)

    # 2) Airlight map, multi-tile Pallas path with a ragged (masked) last tile.
    pred_map = jax.random.uniform(k3, (B, 3, 96, 96), jnp.float32)
    gt_map = jax.random.uniform(k4, (B, 3, 96, 96), jnp.float32)
    loss2 = airlight_l1_loss(pred_map, gt_map, max_rows_per_tile=128)
    jax.block_until_ready(loss2)
    ref2 = jnp.mean(jnp.abs(pred_map - gt_map))
    assert jnp.allclose(loss2, ref2, rtol=1e-5, atol=1e-6), (loss2, ref2)

    # 3) Same map through the default (single big tile, unmasked) path.
    loss3 = airlight_l1_loss(pred_map, gt_map)
    jax.block_until_ready(loss3)
    assert jnp.allclose(loss3, ref2, rtol=1e-5, atol=1e-6), (loss3, ref2)

    # 4) n not a multiple of 128: ragged tile + XLA tail reduction.
    pred_odd = jax.random.uniform(k5, (B, 3, 50, 50), jnp.float32)
    gt_odd = jax.random.uniform(k6, (B, 3, 50, 50), jnp.float32)
    loss4 = airlight_l1_loss(pred_odd, gt_odd, max_rows_per_tile=64)
    jax.block_until_ready(loss4)
    ref4 = jnp.mean(jnp.abs(pred_odd - gt_odd))
    assert jnp.allclose(loss4, ref4, rtol=1e-5, atol=1e-6), (loss4, ref4)

    # 5) bf16 inputs stream in native dtype; f32 accumulation in-kernel.
    pred_bf = pred_map.astype(jnp.bfloat16)
    gt_bf = gt_map.astype(jnp.bfloat16)
    loss5 = airlight_l1_loss(pred_bf, gt_bf, max_rows_per_tile=64)
    jax.block_until_ready(loss5)
    ref5 = jnp.mean(jnp.abs(pred_bf.astype(jnp.float32)
                            - gt_bf.astype(jnp.float32))).astype(jnp.bfloat16)
    assert jnp.allclose(loss5.astype(jnp.float32), ref5.astype(jnp.float32),
                        rtol=2e-2, atol=1e-3), (loss5, ref5)

    print("KERNEL_OK")
</pallas_src>

<mosaic_0001>
module attributes {stable_mosaic.version = 11 : i64} {
  func.func @_l1_partial_kernel(%arg0: i32, %arg1: memref<128x128xf32, #tpu.memory_space<vmem>>, %arg2: memref<128x128xf32, #tpu.memory_space<vmem>>, %arg3: memref<1x8x128xf32, #tpu.memory_space<vmem>>) attributes {dimension_semantics = [#tpu.dimension_semantics<parallel>], iteration_bounds = array<i64: 4>, scalar_prefetch = 0 : i64, scratch_operands = 0 : i64, tpu.core_type = #tpu.core_type<tc>, window_params = [{transform_indices = @transform_0, window_bounds = array<i64: 128, 128>}, {transform_indices = @transform_1, window_bounds = array<i64: 128, 128>}, {transform_indices = @transform_2, window_bounds = array<i64: 1, 8, 128>}]} {
    %c0 = arith.constant 0 : index
    %c0_0 = arith.constant 0 : index
    %0 = vector.load %arg1[%c0, %c0_0] : memref<128x128xf32, #tpu.memory_space<vmem>>, vector<128x128xf32>
    %c0_1 = arith.constant 0 : index
    %c0_2 = arith.constant 0 : index
    %1 = vector.load %arg2[%c0_1, %c0_2] : memref<128x128xf32, #tpu.memory_space<vmem>>, vector<128x128xf32>
    %2 = arith.subf %0, %1 : vector<128x128xf32>
    %3 = math.absf %2 : vector<128x128xf32>
    %c128_i32 = arith.constant 128 : i32
    %4 = arith.muli %arg0, %c128_i32 : i32
    %5 = tpu.iota {dimensions = array<i32: 0>} : vector<128x128xi32>
    %6 = vector.broadcast %4 : i32 to vector<128x128xi32>
    %7 = arith.addi %5, %6 : vector<128x128xi32>
    %c432_i32 = arith.constant 432 : i32
    %8 = vector.broadcast %c432_i32 : i32 to vector<128x128xi32>
    %9 = arith.cmpi slt, %7, %8 : vector<128x128xi32>
    %cst = arith.constant 0.000000e+00 : f32
    %10 = vector.broadcast %cst : f32 to vector<128x128xf32>
    %11 = arith.select %9, %3, %10 : vector<128x128xi1>, vector<128x128xf32>
    %12 = vector.shape_cast %11 : vector<128x128xf32> to vector<16x8x128xf32>
    %cst_3 = arith.constant dense<0.000000e+00> : vector<8x128xf32>
    %13 = vector.multi_reduction <add>, %12, %cst_3 [0] : vector<16x8x128xf32> to vector<8x128xf32>
    %14 = vector.shape_cast %13 : vector<8x128xf32> to vector<1x8x128xf32>
    %c0_4 = arith.constant 0 : index
    %c0_5 = arith.constant 0 : index
    %c0_6 = arith.constant 0 : index
    %15 = vector.load %arg3[%c0_4, %c0_5, %c0_6] : memref<1x8x128xf32, #tpu.memory_space<vmem>>, vector<1x8x128xf32>
    tpu.vector_store %arg3[%c0_4, %c0_5, %c0_6], %14 {strides = array<i32>} : memref<1x8x128xf32, #tpu.memory_space<vmem>>, vector<1x8x128xf32>,
    return
  }
  func.func @transform_0(%arg0: i32) -> (i32, i32) {
    %c0_i32 = arith.constant 0 : i32
    %c0_i32_0 = arith.constant 0 : i32
    return %arg0, %c0_i32 : i32, i32
  }
  func.func @transform_1(%arg0: i32) -> (i32, i32) {
    %c0_i32 = arith.constant 0 : i32
    %c0_i32_0 = arith.constant 0 : i32
    return %arg0, %c0_i32 : i32, i32
  }
  func.func @transform_2(%arg0: i32) -> (i32, i32, i32) {
    %c0_i32 = arith.constant 0 : i32
    %c0_i32_0 = arith.constant 0 : i32
    %c0_i32_1 = arith.constant 0 : i32
    return %arg0, %c0_i32, %c0_i32_0 : i32, i32, i32
  }
}

</mosaic_0001>

<llo_original>
// kernel: tpu_custom_call.1
$region0: #{tpu_custom_call.1}
  #allocation0 [shape = 'u32[]', space=smem, size = 0x4, offset = 0x4, fixed_abs, tag = 'smem constant byte address 0x4 - core index']
  #allocation1 [shape = 'u32[144,128]{1,0:T(1,128)}', space=vmem, size = 0x12000, scoped, tag = 'internal scratch']
  %s0 = inlined_call_operand.hbm [shape: f32[432,128], index: 0, kind: input, shape index: {}]
  %s1 = inlined_call_operand.hbm [shape: f32[432,128], index: 1, kind: input, shape index: {}]
  %s2 = inlined_call_operand.hbm [shape: f32[4,8,128], index: 2, kind: output, shape index: {}]
  %s3 = sld [smem:[#allocation0]]
  $region49: #{tpu_custom_call.1} parent=0
    _
  %s5 = ssub.s32 1, %s3
  %s6 = scalar_select 0, %s5, %s3
  $region1: #{tpu_custom_call.1} parent=0
    #allocation2 [shape = 'u8[131072]{0}', space=vmem, size = 0x20000, scoped, tag = 'input window, operand 0']
    #allocation3 [shape = 's32[2]{0}', space=sflag, size = 0x8, scoped, tag = 'scoped memory for tpu_custom_call.1']
    #allocation4 [shape = 's32[2]{0}', space=sflag, size = 0x8, scoped, tag = 'scoped memory for tpu_custom_call.1']
    #allocation5 [shape = 'u8[131072]{0}', space=vmem, size = 0x20000, scoped, tag = 'input window, operand 1']
    #allocation6 [shape = 's32[2]{0}', space=sflag, size = 0x8, scoped, tag = 'scoped memory for tpu_custom_call.1']
    #allocation7 [shape = 'u8[8192]{0}', space=vmem, size = 0x2000, scoped, tag = 'output window, operand 0']
    %7 = vsyncpa [#allocation3], 0
    %s8 = scalar_lea.sflag [#allocation3], 1
    %9 = vsyncpa %s8, 0
    %10 = vsyncpa [#allocation6], 0
    %s11 = scalar_lea.sflag [#allocation6], 1
    %12 = vsyncpa %s11, 0
    %13 = vsyncpa [#allocation4], 0
    %s14 = scalar_lea.sflag [#allocation4], 1
    %15 = vsyncpa %s14, 0
    loop: start=0, step=1, limit=6
    $region2: #{tpu_custom_call.1} parent=1 // loop_pre_header
      _
    $region3: #{tpu_custom_call.1} parent=1 // loop_header
      %s17 = sphi 0, %s21
      %p18 = scmp.ge.s32.totalorder %s17, 6
      %s27 = sphi 0, %s29
      %s30 = sphi 0, %s27
      %s31 = sphi 0, %s30
      %s47 = sphi 0, %s31
      %s53 = sphi 0, %s55
      %s56 = sphi 0, %s53
      %s57 = sphi 0, %s56
      %s73 = sphi 0, %s57
      %s79 = sphi 0, %s81
      %s82 = sphi 0, %s79
      %s83 = sphi 0, %s82
      %s99 = sphi 0, %s83
    $region4: #{tpu_custom_call.1} parent=1 // loop_header_branch
      %20 = sbr.rel (%p18) target = $region8
    $region5: #{tpu_custom_call.1} parent=1 // loop_body
      %s22 = ssub.s32 %s17, 1
      %s23 = ssub.s32 %s17, 2
      %s24 = sadd.s32 %s17, 1
      %s25 = ssub.s32 %s17, %s24
      %p26 = scmp.eq.s32.totalorder %s25, 0
      %s28 = sadd.s32 %s27, 1
      %s29 = scalar_select %p26, %s27, %s28
      %p32 = pneg %p26
      %p33 = scmp.eq.s32.totalorder %s17, 3
      %p34 = por %p32, %p33
      %p35 = scmp.ne.s32.totalorder %s27, %s30
      %p36 = scmp.eq.s32.totalorder %s17, 0
      %p37 = por %p35, %p36
      %p38 = scmp.ne.s32.totalorder %s27, %s30
      %p39 = scmp.eq.s32.totalorder %s22, 3
      %p40 = por %p38, %p39
      %p41 = scmp.ne.s32.totalorder %s30, %s31
      %p42 = scmp.eq.s32.totalorder %s22, 0
      %p43 = por %p41, %p42
      %p44 = scmp.ne.s32.totalorder %s30, %s31
      %p45 = scmp.eq.s32.totalorder %s23, 3
      %p46 = por %p44, %p45
      %p48 = scmp.ne.s32.totalorder %s31, %s47
      %p49 = scmp.eq.s32.totalorder %s23, 0
      %p50 = por %p48, %p49
      %s51 = ssub.s32 %s17, %s24
      %p52 = scmp.eq.s32.totalorder %s51, 0
      %s54 = sadd.s32 %s53, 1
      %s55 = scalar_select %p52, %s53, %s54
      %p58 = pneg %p52
      %p59 = scmp.eq.s32.totalorder %s17, 3
      %p60 = por %p58, %p59
      %p61 = scmp.ne.s32.totalorder %s53, %s56
      %p62 = scmp.eq.s32.totalorder %s17, 0
      %p63 = por %p61, %p62
      %p64 = scmp.ne.s32.totalorder %s53, %s56
      %p65 = scmp.eq.s32.totalorder %s22, 3
      %p66 = por %p64, %p65
      %p67 = scmp.ne.s32.totalorder %s56, %s57
      %p68 = scmp.eq.s32.totalorder %s22, 0
      %p69 = por %p67, %p68
      %p70 = scmp.ne.s32.totalorder %s56, %s57
      %p71 = scmp.eq.s32.totalorder %s23, 3
      %p72 = por %p70, %p71
      %p74 = scmp.ne.s32.totalorder %s57, %s73
      %p75 = scmp.eq.s32.totalorder %s23, 0
      %p76 = por %p74, %p75
      %s77 = ssub.s32 %s17, %s24
      %p78 = scmp.eq.s32.totalorder %s77, 0
      %s80 = sadd.s32 %s79, 1
      %s81 = scalar_select %p78, %s79, %s80
      %p84 = pneg %p78
      %p85 = scmp.eq.s32.totalorder %s17, 3
      %p86 = por %p84, %p85
      %p87 = scmp.ne.s32.totalorder %s79, %s82
      %p88 = scmp.eq.s32.totalorder %s17, 0
      %p89 = por %p87, %p88
      %p90 = scmp.ne.s32.totalorder %s79, %s82
      %p91 = scmp.eq.s32.totalorder %s22, 3
      %p92 = por %p90, %p91
      %p93 = scmp.ne.s32.totalorder %s82, %s83
      %p94 = scmp.eq.s32.totalorder %s22, 0
      %p95 = por %p93, %p94
      %p96 = scmp.ne.s32.totalorder %s82, %s83
      %p97 = scmp.eq.s32.totalorder %s23, 3
      %p98 = por %p96, %p97
      %p100 = scmp.ne.s32.totalorder %s83, %s99
      %p101 = scmp.eq.s32.totalorder %s23, 0
      %p102 = por %p100, %p101
      %p103 = scmp.le.s32.totalorder 1, %s17
      %p104 = scmp.lt.s32.totalorder %s17, 5
      %p105 = pnand %p103, %p104
      %p106 = pneg %p105
      // Predicated region
      $region9: #{tpu_custom_call.1} parent=5 // pred_check
        _
      $region10: #{tpu_custom_call.1} parent=5 // pred_check_branch
        %108 = sbr.rel (%p105) target = $region12
      $region11: #{tpu_custom_call.1} parent=5 // pred_region
        %s109 = ssub.s32 %s17, 1
      $region12: #{tpu_custom_call.1} parent=5 // pred_fallthru
        _
      %p110 = scmp.lt.s32.totalorder %s17, 4
      // Predicated region
      $region13: #{tpu_custom_call.1} parent=5 // pred_check
        %p111 = pneg %p110
      $region14: #{tpu_custom_call.1} parent=5 // pred_check_branch
        %113 = sbr.rel (%p111) target = $region16
      $region15: #{tpu_custom_call.1} parent=5 // pred_region
        // Predicated region
        $region17: #{tpu_custom_call.1} parent=15 // pred_check
          %p114 = pneg %p37
        $region18: #{tpu_custom_call.1} parent=15 // pred_check_branch
          %116 = sbr.rel (%p114) target = $region20
        $region19: #{tpu_custom_call.1} parent=15 // pred_region
          %s117 = sand.u32 %s27, 1
          %s118 = scalar_lea.sflag [#allocation3], %s117
          %s119 = sand.u32 %s27, 1
          %s120 = smul.addr %s119, 128
          %s121 = scalar_lea.vmem [#allocation2], %s120
          %s122 = smul.u32 16, %s17
          %s123 = ssub.s32 54, %s122
          %p124 = scmp.lt.s32.totalorder %s123, 16
          %s125 = scalar_select %p124, %s123, 16
          %s126 = smul.u32 128, %s125
          %s128 = ssub.s32 2048, %s126
          %129 = vsyncadd %s118, %s128
          %p130 = scmp.ne.s32.totalorder 0, %s126
          %s131 = smul.addr %s122, 128
          %s132 = scalar_lea.hbm %s0, %s131
          %s133 = smul.u32 8, %s125
          %s134 = sshll.u32 %s121, 4
          %s135 = int_to_ptr.vmem [resolvable:$true] %s134
          %s136 = sshll.u32 %s133, 4
          %140 = dma.hbm_to_vmem [thread:$0]  (%p130), %s132, %s136, %s135, %s118, 128, 128, 8
        $region20: #{tpu_custom_call.1} parent=15 // pred_fallthru
          _
        // Predicated region
        $region21: #{tpu_custom_call.1} parent=15 // pred_check
          %p141 = pneg %p63
        $region22: #{tpu_custom_call.1} parent=15 // pred_check_branch
          %143 = sbr.rel (%p141) target = $region24
        $region23: #{tpu_custom_call.1} parent=15 // pred_region
          %s144 = sand.u32 %s53, 1
          %s145 = scalar_lea.sflag [#allocation6], %s144
          %s146 = sand.u32 %s53, 1
          %s147 = smul.addr %s146, 128
          %s148 = scalar_lea.vmem [#allocation5], %s147
          %s149 = smul.u32 16, %s17
          %s150 = ssub.s32 54, %s149
          %p151 = scmp.lt.s32.totalorder %s150, 16
          %s152 = scalar_select %p151, %s150, 16
          %s153 = smul.u32 128, %s152
          %s155 = ssub.s32 2048, %s153
          %156 = vsyncadd %s145, %s155
          %p157 = scmp.ne.s32.totalorder 0, %s153
          %s158 = smul.addr %s149, 128
          %s159 = scalar_lea.hbm %s1, %s158
          %s160 = smul.u32 8, %s152
          %s161 = sshll.u32 %s148, 4
          %s162 = int_to_ptr.vmem [resolvable:$true] %s161
          %s163 = sshll.u32 %s160, 4
          %167 = dma.hbm_to_vmem [thread:$0]  (%p157), %s159, %s163, %s162, %s145, 128, 128, 8
        $region24: #{tpu_custom_call.1} parent=15 // pred_fallthru
          _
      $region16: #{tpu_custom_call.1} parent=5 // pred_fallthru
        _
      %p168 = scmp.le.s32.totalorder 1, %s17
      %p169 = scmp.lt.s32.totalorder %s17, 5
      %p170 = pnand %p168, %p169
      %p171 = pneg %p170
      // Predicated region
      $region25: #{tpu_custom_call.1} parent=5 // pred_check
        _
      $region26: #{tpu_custom_call.1} parent=5 // pred_check_branch
        %173 = sbr.rel (%p170) target = $region28
      $region27: #{tpu_custom_call.1} parent=5 // pred_region
        %s174 = ssub.s32 %s17, 1
        %s175 = sand.u32 %s30, 1
        %s176 = scalar_lea.sflag [#allocation3], %s175
        %s177 = sand.u32 %s30, 1
        %s178 = smul.addr %s177, 128
        %s179 = scalar_lea.vmem [#allocation2], %s178
        // Predicated region
        $region29: #{tpu_custom_call.1} parent=27 // pred_check
          %p180 = pneg %p43
        $region30: #{tpu_custom_call.1} parent=27 // pred_check_branch
          %182 = sbr.rel (%p180) target = $region32
        $region31: #{tpu_custom_call.1} parent=27 // pred_region
          %183 = dma.done %s176, 2048
        $region32: #{tpu_custom_call.1} parent=27 // pred_fallthru
          _
        %s184 = sand.u32 %s56, 1
        %s185 = scalar_lea.sflag [#allocation6], %s184
        %s186 = sand.u32 %s56, 1
        %s187 = smul.addr %s186, 128
        %s188 = scalar_lea.vmem [#allocation5], %s187
        // Predicated region
        $region33: #{tpu_custom_call.1} parent=27 // pred_check
          %p189 = pneg %p69
        $region34: #{tpu_custom_call.1} parent=27 // pred_check_branch
          %191 = sbr.rel (%p189) target = $region36
        $region35: #{tpu_custom_call.1} parent=27 // pred_region
          %192 = dma.done %s185, 2048
        $region36: #{tpu_custom_call.1} parent=27 // pred_fallthru
          _
        %s193 = sand.u32 %s30, 1
        %s194 = scalar_lea.sflag [#allocation3], %s193
        %s195 = sand.u32 %s30, 1
        %s196 = smul.addr %s195, 128
        %s197 = scalar_lea.vmem [#allocation2], %s196
        %p198 = pneg %p43
        %p199 = pneg %p40
        %s200 = sand.u32 %s56, 1
        %s201 = scalar_lea.sflag [#allocation6], %s200
        %s202 = sand.u32 %s56, 1
        %s203 = smul.addr %s202, 128
        %s204 = scalar_lea.vmem [#allocation5], %s203
        %p205 = pneg %p69
        %p206 = pneg %p66
        %p207 = pneg %p95
        %p208 = pneg %p92
        %s209 = sand.u32 %s82, 1
        %s210 = scalar_lea.sflag [#allocation4], %s209
        %s211 = sand.u32 %s82, 1
        %s212 = smul.addr %s211, 8
        %s213 = scalar_lea.vmem [#allocation7], %s212
        %s214 = smul.u32 16, %s22
        %s215 = ssub.s32 54, %s214
        %p216 = scmp.lt.s32.totalorder %s215, 16
        %s217 = scalar_select %p216, %s215, 16
        %s218 = smul.u32 128, %s217
        %s219 = smul.u32 16, %s22
        %s220 = ssub.s32 54, %s219
        %p221 = scmp.lt.s32.totalorder %s220, 16
        %s222 = scalar_select %p221, %s220, 16
        %s223 = smul.u32 128, %s222
        %v224 = vld [vmem:[%s179] sm:$0xff]
        %v225 = vld [vmem:[%s179 + $0x8] sm:$0xff]
        %v226 = vld [vmem:[%s179 + $0x10] sm:$0xff]
        %v227 = vld [vmem:[%s179 + $0x18] sm:$0xff]
        %v228 = vld [vmem:[%s179 + $0x20] sm:$0xff]
        %v229 = vld [vmem:[%s179 + $0x28] sm:$0xff]
        %v230 = vld [vmem:[%s179 + $0x30] sm:$0xff]
        %v231 = vld [vmem:[%s179 + $0x38] sm:$0xff]
        %v232 = vld [vmem:[%s179 + $0x40] sm:$0xff]
        %v233 = vld [vmem:[%s179 + $0x48] sm:$0xff]
        %v234 = vld [vmem:[%s179 + $0x50] sm:$0xff]
        %v235 = vld [vmem:[%s179 + $0x58] sm:$0xff]
        %v236 = vld [vmem:[%s179 + $0x60] sm:$0xff]
        %v237 = vld [vmem:[%s179 + $0x68] sm:$0xff]
        %v238 = vld [vmem:[%s179 + $0x70] sm:$0xff]
        %v239 = vld [vmem:[%s179 + $0x78] sm:$0xff]
        %v240 = vld [vmem:[%s188] sm:$0xff]
        %v241 = vld [vmem:[%s188 + $0x8] sm:$0xff]
        %v242 = vld [vmem:[%s188 + $0x10] sm:$0xff]
        %v243 = vld [vmem:[%s188 + $0x18] sm:$0xff]
        %v244 = vld [vmem:[%s188 + $0x20] sm:$0xff]
        %v245 = vld [vmem:[%s188 + $0x28] sm:$0xff]
        %v246 = vld [vmem:[%s188 + $0x30] sm:$0xff]
        %v247 = vld [vmem:[%s188 + $0x38] sm:$0xff]
        %v248 = vld [vmem:[%s188 + $0x40] sm:$0xff]
        %v249 = vld [vmem:[%s188 + $0x48] sm:$0xff]
        %v250 = vld [vmem:[%s188 + $0x50] sm:$0xff]
        %v251 = vld [vmem:[%s188 + $0x58] sm:$0xff]
        %v252 = vld [vmem:[%s188 + $0x60] sm:$0xff]
        %v253 = vld [vmem:[%s188 + $0x68] sm:$0xff]
        %v254 = vld [vmem:[%s188 + $0x70] sm:$0xff]
        %v255 = vld [vmem:[%s188 + $0x78] sm:$0xff]
        %v256 = vsub.f32 %v224, %v240
        %v257 = vsub.f32 %v225, %v241
        %v258 = vsub.f32 %v226, %v242
        %v259 = vsub.f32 %v227, %v243
        %v260 = vsub.f32 %v228, %v244
        %v261 = vsub.f32 %v229, %v245
        %v262 = vsub.f32 %v230, %v246
        %v263 = vsub.f32 %v231, %v247
        %v264 = vsub.f32 %v232, %v248
        %v265 = vsub.f32 %v233, %v249
        %v266 = vsub.f32 %v234, %v250
        %v267 = vsub.f32 %v235, %v251
        %v268 = vsub.f32 %v236, %v252
        %v269 = vsub.f32 %v237, %v253
        %v270 = vsub.f32 %v238, %v254
        %v271 = vsub.f32 %v239, %v255
        %v272 = vand.u32 2147483647, %v256
        %v273 = vand.u32 2147483647, %v257
        %v274 = vand.u32 2147483647, %v258
        %v275 = vand.u32 2147483647, %v259
        %v276 = vand.u32 2147483647, %v260
        %v277 = vand.u32 2147483647, %v261
        %v278 = vand.u32 2147483647, %v262
        %v279 = vand.u32 2147483647, %v263
        %v280 = vand.u32 2147483647, %v264
        %v281 = vand.u32 2147483647, %v265
        %v282 = vand.u32 2147483647, %v266
        %v283 = vand.u32 2147483647, %v267
        %v284 = vand.u32 2147483647, %v268
        %v285 = vand.u32 2147483647, %v269
        %v286 = vand.u32 2147483647, %v270
        %v287 = vand.u32 2147483647, %v271
        %s288 = smul.u32 %s22, 128
        %v289 = vlaneseq
        %v290 = vshrl.u32 %v289, 7
        %v291 = vadd.s32 %v290, 8
        %v292 = vadd.s32 %v290, 16
        %v293 = vadd.s32 %v290, 24
        %v294 = vadd.s32 %v290, 32
        %v295 = vadd.s32 %v290, 40
        %v296 = vadd.s32 %v290, 48
        %v297 = vadd.s32 %v290, 56
        %v298 = vadd.s32 %v290, 64
        %v299 = vadd.s32 %v290, 72
        %v300 = vadd.s32 %v290, 80
        %v301 = vadd.s32 %v290, 88
        %v302 = vadd.s32 %v290, 96
        %v303 = vadd.s32 %v290, 104
        %v304 = vadd.s32 %v290, 112
        %v305 = vadd.s32 %v290, 120
        %v306 = vstv %s288
        %v307 = vadd.s32 %v290, %v306
        %v308 = vadd.s32 %v291, %v306
        %v309 = vadd.s32 %v292, %v306
        %v310 = vadd.s32 %v293, %v306
        %v311 = vadd.s32 %v294, %v306
        %v312 = vadd.s32 %v295, %v306
        %v313 = vadd.s32 %v296, %v306
        %v314 = vadd.s32 %v297, %v306
        %v315 = vadd.s32 %v298, %v306
        %v316 = vadd.s32 %v299, %v306
        %v317 = vadd.s32 %v300, %v306
        %v318 = vadd.s32 %v301, %v306
        %v319 = vadd.s32 %v302, %v306
        %v320 = vadd.s32 %v303, %v306
        %v321 = vadd.s32 %v304, %v306
        %v322 = vadd.s32 %v305, %v306
        %vm323 = vcmp.lt.s32.totalorder %v307, 432
        %vm324 = vcmp.lt.s32.totalorder %v308, 432
        %vm325 = vcmp.lt.s32.totalorder %v309, 432
        %vm326 = vcmp.lt.s32.totalorder %v310, 432
        %vm327 = vcmp.lt.s32.totalorder %v311, 432
        %vm328 = vcmp.lt.s32.totalorder %v312, 432
        %vm329 = vcmp.lt.s32.totalorder %v313, 432
        %vm330 = vcmp.lt.s32.totalorder %v314, 432
        %vm331 = vcmp.lt.s32.totalorder %v315, 432
        %vm332 = vcmp.lt.s32.totalorder %v316, 432
        %vm333 = vcmp.lt.s32.totalorder %v317, 432
        %vm334 = vcmp.lt.s32.totalorder %v318, 432
        %vm335 = vcmp.lt.s32.totalorder %v319, 432
        %vm336 = vcmp.lt.s32.totalorder %v320, 432
        %vm337 = vcmp.lt.s32.totalorder %v321, 432
        %vm338 = vcmp.lt.s32.totalorder %v322, 432
        %v339 = vsel %vm323, %v272, 0.0
        %v340 = vsel %vm324, %v273, 0.0
        %v341 = vsel %vm325, %v274, 0.0
        %v342 = vsel %vm326, %v275, 0.0
        %v343 = vsel %vm327, %v276, 0.0
        %v344 = vsel %vm328, %v277, 0.0
        %v345 = vsel %vm329, %v278, 0.0
        %v346 = vsel %vm330, %v279, 0.0
        %v347 = vsel %vm331, %v280, 0.0
        %v348 = vsel %vm332, %v281, 0.0
        %v349 = vsel %vm333, %v282, 0.0
        %v350 = vsel %vm334, %v283, 0.0
        %v351 = vsel %vm335, %v284, 0.0
        %v352 = vsel %vm336, %v285, 0.0
        %v353 = vsel %vm337, %v286, 0.0
        %v354 = vsel %vm338, %v287, 0.0
        %v355 = vadd.f32 %v339, %v340
        %v356 = vadd.f32 %v355, %v341
        %v357 = vadd.f32 %v356, %v342
        %v358 = vadd.f32 %v357, %v343
        %v359 = vadd.f32 %v358, %v344
        %v360 = vadd.f32 %v359, %v345
        %v361 = vadd.f32 %v360, %v346
        %v362 = vadd.f32 %v361, %v347
        %v363 = vadd.f32 %v362, %v348
        %v364 = vadd.f32 %v363, %v349
        %v365 = vadd.f32 %v364, %v350
        %v366 = vadd.f32 %v365, %v351
        %v367 = vadd.f32 %v366, %v352
        %v368 = vadd.f32 %v367, %v353
        %v369 = vadd.f32 %v368, %v354
        %370 = vst [vmem:[%s213] sm:$0xff] %v369
        %s371 = sand.u32 %s82, 1
        %s372 = scalar_lea.sflag [#allocation4], %s371
        %s373 = sand.u32 %s82, 1
        %s374 = smul.addr %s373, 8
        %s375 = scalar_lea.vmem [#allocation7], %s374
        // Predicated region
        $region37: #{tpu_custom_call.1} parent=27 // pred_check
          %p376 = pneg %p92
        $region38: #{tpu_custom_call.1} parent=27 // pred_check_branch
          %378 = sbr.rel (%p376) target = $region40
        $region39: #{tpu_custom_call.1} parent=27 // pred_region
          %s380 = ssub.s32 128, 128
          %381 = vsyncadd %s372, %s380
          %s382 = smul.addr %s22, 128
          %s383 = scalar_lea.hbm %s2, %s382
          %s385 = sshll.u32 %s375, 4
          %s386 = int_to_ptr.vmem [resolvable:$true] %s385
          %388 = dma.vmem_to_hbm [thread:$0]  %s386, 128, %s383, %s372
        $region40: #{tpu_custom_call.1} parent=27 // pred_fallthru
          _
      $region28: #{tpu_custom_call.1} parent=5 // pred_fallthru
        _
      %p389 = scmp.le.s32.totalorder 2, %s17
      // Predicated region
      $region41: #{tpu_custom_call.1} parent=5 // pred_check
        %p390 = pneg %p389
      $region42: #{tpu_custom_call.1} parent=5 // pred_check_branch
        %392 = sbr.rel (%p390) target = $region44
      $region43: #{tpu_custom_call.1} parent=5 // pred_region
        %s393 = ssub.s32 %s17, 2
        // Predicated region
        $region45: #{tpu_custom_call.1} parent=43 // pred_check
          %p394 = pneg %p98
        $region46: #{tpu_custom_call.1} parent=43 // pred_check_branch
          %396 = sbr.rel (%p394) target = $region48
        $region47: #{tpu_custom_call.1} parent=43 // pred_region
          %s397 = sand.u32 %s83, 1
          %s398 = scalar_lea.sflag [#allocation4], %s397
          %s399 = sand.u32 %s83, 1
          %s400 = smul.addr %s399, 8
          %s401 = scalar_lea.vmem [#allocation7], %s400
          %402 = dma.done %s398, 128
        $region48: #{tpu_custom_call.1} parent=43 // pred_fallthru
          _
      $region44: #{tpu_custom_call.1} parent=5 // pred_fallthru
        _
    $region6: #{tpu_custom_call.1} parent=1 // loop_footer
      %s21 = sadd.s32 1, %s17
    $region7: #{tpu_custom_call.1} parent=1 // loop_footer_branch
      %16 = sbr.rel target = $region3
    $region8: #{tpu_custom_call.1} parent=1 // loop_exit
      _
    %403 = vsyncpa [#allocation3], 1
    %s404 = scalar_lea.sflag [#allocation3], 1
    %405 = vsyncpa %s404, 1
    %406 = vsyncpa [#allocation6], 1
    %s407 = scalar_lea.sflag [#allocation6], 1
    %408 = vsyncpa %s407, 1
    %409 = vsyncpa [#allocation4], 1
    %s410 = scalar_lea.sflag [#allocation4], 1
    %411 = vsyncpa %s410, 1

</llo_original>
